<compile_context>
chip_gen: v5e
topology: v5e:2x2
jax: 0.10.0
libtpu: 0.0.40
codegen_flags: <defaults>
</compile_context>

<pallas_src>
import functools

import jax
import jax.numpy as jnp
from jax.experimental import pallas as pl
from jax.experimental.pallas import tpu as pltpu

_EPS = 1e-8  # matches torch.nn.CosineSimilarity default eps


def _similarity_kernel(x_ref, y_ref, inv_xn_ref, inv_yn_ref, o_ref):
    # x_ref: [TM, Hp], y_ref: [TN, Hp]  (input dtype; bf16 stays bf16 on MXU)
    # inv_xn_ref: [TM, 1] f32 = (1/temp) / max(||x_i||, eps)
    # inv_yn_ref: [1, TN] f32 =       1  / max(||y_j||, eps)
    # o_ref: [TM, TN]
    dots = jax.lax.dot_general(
        x_ref[...], y_ref[...],
        dimension_numbers=(((1,), (1,)), ((), ())),   # contract on H, no y.T
        preferred_element_type=jnp.float32,
    )                                                  # [TM, TN] f32
    # Separable epilogue: two broadcast multiplies, no full-tile reciprocal.
    o_ref[...] = (dots * inv_xn_ref[...] * inv_yn_ref[...]).astype(o_ref.dtype)


def _round_up(a, b):
    return ((a + b - 1) // b) * b


def _pick_tile(size, max_tile, align, want_two_steps=False):
    """Pick a tile (multiple of `align`) dividing the padded extent.

    With want_two_steps, prefer tiles that leave >= 2 grid steps so that a
    "parallel" grid axis can be sharded across v7x's two TensorCores.
    """
    padded = _round_up(max(size, 1), align)
    cand_max = min(max_tile, padded)
    best = align
    for t in range(align, cand_max + 1, align):
        if padded % t != 0:
            continue
        if want_two_steps and padded >= 2 * align and padded // t < 2:
            continue
        best = t
    return best, padded


def similarity(x, y, temp, *, tile_m=512, tile_n=512,
               out_dtype=jnp.float32, mxu_dtype=None):
    """x: [M, 1, H], y: [1, N, H]  ->  [M, N] cosine similarity / temp."""
    assert x.ndim == 3 and y.ndim == 3 and x.shape[1] == 1 and y.shape[0] == 1
    assert x.shape[-1] == y.shape[-1]
    x2d = x[:, 0, :]                    # [M, H]
    y2d = y[0, :, :]                    # [N, H]
    M, H = x2d.shape
    N, _ = y2d.shape
    inv_temp = 1.0 / float(temp)

    # Hoisted per-row inverse norms (tiny XLA reduction, read once) instead of
    # recomputing them for every (i, j) output tile inside the kernel.
    # Clamp the sum of squares BEFORE rsqrt so zero(-padded) rows give 0, not NaN.
    sq_x = jnp.sum(jnp.square(x2d.astype(jnp.float32)), axis=-1, keepdims=True)
    sq_y = jnp.sum(jnp.square(y2d.astype(jnp.float32)), axis=-1, keepdims=True)
    inv_xn = (inv_temp / jnp.sqrt(jnp.maximum(sq_x, _EPS * _EPS)))      # [M,1]
    inv_yn = (1.0 / jnp.sqrt(jnp.maximum(sq_y, _EPS * _EPS))).T         # [1,N]

    # Optional: feed the MXU bf16 operands (recommended on v5e for f32 inputs);
    # the norm path above already ran in f32 on the original values.
    if mxu_dtype is not None:
        x2d = x2d.astype(mxu_dtype)
        y2d = y2d.astype(mxu_dtype)

    # Tile selection: clamp to the padded problem size (no wasted MACs for
    # small batches) and keep >= 2 steps along N when possible (megacore).
    itemsize = jnp.dtype(x2d.dtype).itemsize
    sub_m = max(8, 32 // itemsize)          # 8 for f32, 16 for bf16
    tm, Mp = _pick_tile(M, tile_m, sub_m)
    tn, Np = _pick_tile(N, tile_n, 128, want_two_steps=True)
    Hp = _round_up(H, 128)

    # Zero-pad to tile multiples (no-op at real SimCSE sizes: H = 768/1024,
    # M = N = batch).  Padded rows have inv-norm 0 -> exact 0 output, sliced off.
    if (Mp, Hp) != (M, H):
        x2d = jnp.pad(x2d, ((0, Mp - M), (0, Hp - H)))
        inv_xn = jnp.pad(inv_xn, ((0, Mp - M), (0, 0)))
    if (Np, Hp) != (N, H):
        y2d = jnp.pad(y2d, ((0, Np - N), (0, Hp - H)))
        inv_yn = jnp.pad(inv_yn, ((0, 0), (0, Np - N)))

    out_bytes = Mp * Np * jnp.dtype(out_dtype).itemsize
    cost = pl.CostEstimate(
        flops=2 * Mp * Np * Hp,
        transcendentals=0,
        bytes_accessed=(x2d.size * itemsize + y2d.size * itemsize
                        + 4 * (inv_xn.size + inv_yn.size) + out_bytes),
    )

    # TODO(synk): if H ever grows beyond what fits VMEM per tile, add a K grid
    # axis with a f32 VMEM accumulator (@pl.when init/finalize) for the dots.
    out = pl.pallas_call(
        _similarity_kernel,
        out_shape=jax.ShapeDtypeStruct((Mp, Np), out_dtype),
        grid=(Mp // tm, Np // tn),
        in_specs=[
            pl.BlockSpec((tm, Hp), lambda i, j: (i, 0)),
            pl.BlockSpec((tn, Hp), lambda i, j: (j, 0)),
            pl.BlockSpec((tm, 1), lambda i, j: (i, 0)),
            pl.BlockSpec((1, tn), lambda i, j: (0, j)),
        ],
        out_specs=pl.BlockSpec((tm, tn), lambda i, j: (i, j)),
        compiler_params=pltpu.CompilerParams(
            dimension_semantics=("parallel", "parallel"),
            vmem_limit_bytes=32 * 1024 * 1024,
        ),
        cost_estimate=cost,
    )(x2d, y2d, inv_xn, inv_yn)

    return out[:M, :N]


if __name__ == "__main__":
    # Deterministic "parameter": SimCSE default temperature.
    temp = 0.05

    key = jax.random.PRNGKey(0)
    kx, ky = jax.random.split(key)
    M, N, H = 8, 8, 32
    z1 = jax.random.normal(kx, (M, H), dtype=jnp.float32)
    z2 = jax.random.normal(ky, (N, H), dtype=jnp.float32)

    # SimCSE-style broadcast shapes: x=[M,1,H], y=[1,N,H]
    x = z1[:, None, :]
    y = z2[None, :, :]

    out = jax.block_until_ready(similarity(x, y, temp))

    # Pure-JAX reference (mirrors torch CosineSimilarity semantics).
    xn = jnp.linalg.norm(z1, axis=-1, keepdims=True)
    yn = jnp.linalg.norm(z2, axis=-1, keepdims=True)
    dots = jnp.einsum("mh,nh->mn", z1, z2, precision=jax.lax.Precision.HIGHEST)
    ref = dots / jnp.maximum(xn * yn.T, _EPS) / temp

    assert out.shape == (M, N)
    assert out.dtype == jnp.float32
    # Tolerance is tight now: exact per-row rsqrt replaced the approx
    # full-tile reciprocal that was being amplified by 1/temp = 20x.
    assert jnp.allclose(out, ref, rtol=2e-3, atol=1e-3)
    print("KERNEL_OK")
</pallas_src>

<mosaic_0001>
module attributes {stable_mosaic.version = 11 : i64} {
  func.func @_similarity_kernel(%arg0: i32, %arg1: i32, %arg2: memref<8x128xf32, #tpu.memory_space<vmem>>, %arg3: memref<128x128xf32, #tpu.memory_space<vmem>>, %arg4: memref<8x1xf32, #tpu.memory_space<vmem>>, %arg5: memref<1x128xf32, #tpu.memory_space<vmem>>, %arg6: memref<8x128xf32, #tpu.memory_space<vmem>>) attributes {dimension_semantics = [#tpu.dimension_semantics<parallel>, #tpu.dimension_semantics<parallel>], iteration_bounds = array<i64: 1, 1>, scalar_prefetch = 0 : i64, scratch_operands = 0 : i64, tpu.core_type = #tpu.core_type<tc>, window_params = [{transform_indices = @transform_0, window_bounds = array<i64: 8, 128>}, {transform_indices = @transform_1, window_bounds = array<i64: 128, 128>}, {transform_indices = @transform_2, window_bounds = array<i64: 8, 1>}, {transform_indices = @transform_3, window_bounds = array<i64: 1, 128>}, {transform_indices = @transform_4, window_bounds = array<i64: 8, 128>}]} {
    %c0 = arith.constant 0 : index
    %c0_0 = arith.constant 0 : index
    %0 = vector.load %arg2[%c0, %c0_0] : memref<8x128xf32, #tpu.memory_space<vmem>>, vector<8x128xf32>
    %c0_1 = arith.constant 0 : index
    %c0_2 = arith.constant 0 : index
    %1 = vector.load %arg3[%c0_1, %c0_2] : memref<128x128xf32, #tpu.memory_space<vmem>>, vector<128x128xf32>
    %cst = arith.constant dense<0.000000e+00> : vector<8x128xf32>
    %2 = tpu.matmul %0, %1, %cst {dimension_numbers = #tpu.dot_dimension_numbers<[1], [1], [0], [0], [0, 0, 1, 0], [], []>} : vector<8x128xf32>, vector<128x128xf32>, vector<8x128xf32> -> vector<8x128xf32>
    %c0_3 = arith.constant 0 : index
    %c0_4 = arith.constant 0 : index
    %3 = vector.load %arg4[%c0_3, %c0_4] : memref<8x1xf32, #tpu.memory_space<vmem>>, vector<8x1xf32>
    %4 = vector.broadcast %3 : vector<8x1xf32> to vector<8x128xf32>
    %5 = arith.mulf %2, %4 : vector<8x128xf32>
    %c0_5 = arith.constant 0 : index
    %c0_6 = arith.constant 0 : index
    %6 = vector.load %arg5[%c0_5, %c0_6] : memref<1x128xf32, #tpu.memory_space<vmem>>, vector<1x128xf32>
    %7 = vector.broadcast %6 : vector<1x128xf32> to vector<8x128xf32>
    %8 = arith.mulf %5, %7 : vector<8x128xf32>
    %c0_7 = arith.constant 0 : index
    %c0_8 = arith.constant 0 : index
    %9 = vector.load %arg6[%c0_7, %c0_8] : memref<8x128xf32, #tpu.memory_space<vmem>>, vector<8x128xf32>
    tpu.vector_store %arg6[%c0_7, %c0_8], %8 {strides = array<i32>} : memref<8x128xf32, #tpu.memory_space<vmem>>, vector<8x128xf32>,
    return
  }
  func.func @transform_0(%arg0: i32, %arg1: i32) -> (i32, i32) {
    %c0_i32 = arith.constant 0 : i32
    %c0_i32_0 = arith.constant 0 : i32
    return %arg0, %c0_i32 : i32, i32
  }
  func.func @transform_1(%arg0: i32, %arg1: i32) -> (i32, i32) {
    %c0_i32 = arith.constant 0 : i32
    %c0_i32_0 = arith.constant 0 : i32
    return %arg1, %c0_i32 : i32, i32
  }
  func.func @transform_2(%arg0: i32, %arg1: i32) -> (i32, i32) {
    %c0_i32 = arith.constant 0 : i32
    %c0_i32_0 = arith.constant 0 : i32
    return %arg0, %c0_i32 : i32, i32
  }
  func.func @transform_3(%arg0: i32, %arg1: i32) -> (i32, i32) {
    %c0_i32 = arith.constant 0 : i32
    %c0_i32_0 = arith.constant 0 : i32
    return %c0_i32, %arg1 : i32, i32
  }
  func.func @transform_4(%arg0: i32, %arg1: i32) -> (i32, i32) {
    %c0_i32 = arith.constant 0 : i32
    return %arg0, %arg1 : i32, i32
  }
}

</mosaic_0001>

<llo_original>
// kernel: tpu_custom_call.1
$region0: #{tpu_custom_call.1}
  #allocation0 [shape = 'u32[]', space=smem, size = 0x4, offset = 0x4, fixed_abs, tag = 'smem constant byte address 0x4 - core index']
  #allocation1 [shape = 'u32[72,128]{1,0:T(1,128)}', space=vmem, size = 0x9000, scoped, tag = 'internal scratch']
  %s0 = inlined_call_operand.vmem [shape: f32[8,128], index: 0, kind: input, shape index: {}]
  %s1 = inlined_call_operand.hbm [shape: f32[128,128], index: 1, kind: input, shape index: {}]
  %s2 = inlined_call_operand.vmem [shape: f32[8,1], index: 2, kind: input, shape index: {}]
  %s3 = inlined_call_operand.vmem [shape: f32[1,128], index: 3, kind: input, shape index: {}]
  %s4 = inlined_call_operand.hbm [shape: f32[8,128], index: 4, kind: output, shape index: {}]
  %s5 = sld [smem:[#allocation0]]
  $region30: #{tpu_custom_call.1} parent=0
    _
  %s7 = ssub.s32 1, %s5
  %s8 = scalar_select 0, %s7, %s5
  $region1: #{tpu_custom_call.1} parent=0
    #allocation2 [shape = 'u8[65536]{0}', space=vmem, size = 0x10000, scoped, tag = 'input window, operand 1, single buffered']
    #allocation3 [shape = 's32[1]{0}', space=sflag, size = 0x4, scoped, tag = 'scoped memory for tpu_custom_call.1']
    #allocation4 [shape = 's32[1]{0}', space=sflag, size = 0x4, scoped, tag = 'scoped memory for tpu_custom_call.1']
    #allocation5 [shape = 'u8[4096]{0}', space=vmem, size = 0x1000, scoped, tag = 'output window, operand 0, single buffered']
    %9 = vsyncpa [#allocation3], 0
    %10 = vsyncpa [#allocation4], 0
    // Predicated region
    $region2: #{tpu_custom_call.1} parent=1 // pred_check
      _
    $region3: #{tpu_custom_call.1} parent=1 // pred_check_branch
      %12 = sbr.rel (0) target = $region5
    $region4: #{tpu_custom_call.1} parent=1 // pred_region
      _
    $region5: #{tpu_custom_call.1} parent=1 // pred_fallthru
      _
    // Predicated region
    $region6: #{tpu_custom_call.1} parent=1 // pred_check
      _
    $region7: #{tpu_custom_call.1} parent=1 // pred_check_branch
      %14 = sbr.rel (0) target = $region9
    $region8: #{tpu_custom_call.1} parent=1 // pred_region
      %16 = vsyncadd [#allocation3], 0
      %s17 = sshll.u32 %s1, 4
      %s18 = int_to_ptr.hbm [resolvable:$true] %s17
      %s19 = sshll.u32 [#allocation2], 4
      %s20 = int_to_ptr.vmem [resolvable:$true] %s19
      %25 = dma.hbm_to_vmem [thread:$0]  %s18, 2048, %s20, [#allocation3], 128, 128, 8
    $region9: #{tpu_custom_call.1} parent=1 // pred_fallthru
      _
    // Predicated region
    $region10: #{tpu_custom_call.1} parent=1 // pred_check
      _
    $region11: #{tpu_custom_call.1} parent=1 // pred_check_branch
      %27 = sbr.rel (0) target = $region13
    $region12: #{tpu_custom_call.1} parent=1 // pred_region
      _
    $region13: #{tpu_custom_call.1} parent=1 // pred_fallthru
      _
    // Predicated region
    $region14: #{tpu_custom_call.1} parent=1 // pred_check
      _
    $region15: #{tpu_custom_call.1} parent=1 // pred_check_branch
      %29 = sbr.rel (0) target = $region17
    $region16: #{tpu_custom_call.1} parent=1 // pred_region
      _
    $region17: #{tpu_custom_call.1} parent=1 // pred_fallthru
      _
    // Predicated region
    $region18: #{tpu_custom_call.1} parent=1 // pred_check
      _
    $region19: #{tpu_custom_call.1} parent=1 // pred_check_branch
      %31 = sbr.rel (0) target = $region21
    $region20: #{tpu_custom_call.1} parent=1 // pred_region
      %33 = dma.done [#allocation3], 2048
    $region21: #{tpu_custom_call.1} parent=1 // pred_fallthru
      _
    %v34 = vld [vmem:[%s0] sm:$0xff]
    %v35 = vld [vmem:[#allocation2] sm:$0xff]
    %v36 = vld [vmem:[#allocation2 + $0x8] sm:$0xff]
    %v37 = vld [vmem:[#allocation2 + $0x10] sm:$0xff]
    %v38 = vld [vmem:[#allocation2 + $0x18] sm:$0xff]
    %v39 = vld [vmem:[#allocation2 + $0x20] sm:$0xff]
    %v40 = vld [vmem:[#allocation2 + $0x28] sm:$0xff]
    %v41 = vld [vmem:[#allocation2 + $0x30] sm:$0xff]
    %v42 = vld [vmem:[#allocation2 + $0x38] sm:$0xff]
    %v43 = vld [vmem:[#allocation2 + $0x40] sm:$0xff]
    %v44 = vld [vmem:[#allocation2 + $0x48] sm:$0xff]
    %v45 = vld [vmem:[#allocation2 + $0x50] sm:$0xff]
    %v46 = vld [vmem:[#allocation2 + $0x58] sm:$0xff]
    %v47 = vld [vmem:[#allocation2 + $0x60] sm:$0xff]
    %v48 = vld [vmem:[#allocation2 + $0x68] sm:$0xff]
    %v49 = vld [vmem:[#allocation2 + $0x70] sm:$0xff]
    %v50 = vld [vmem:[#allocation2 + $0x78] sm:$0xff]
    %51 = vmatpush.xpose.msra.mxu0 %v50
    %52 = vmatpush.xpose.msra.mxu0 %v49
    %53 = vmatpush.xpose.msra.mxu0 %v48
    %54 = vmatpush.xpose.msra.mxu0 %v47
    %55 = vmatpush.xpose.msra.mxu0 %v46
    %56 = vmatpush.xpose.msra.mxu0 %v45
    %57 = vmatpush.xpose.msra.mxu0 %v44
    %58 = vmatpush.xpose.msra.mxu0 %v43
    %59 = vmatpush.xpose.msra.mxu0 %v42
    %60 = vmatpush.xpose.msra.mxu0 %v41
    %61 = vmatpush.xpose.msra.mxu0 %v40
    %62 = vmatpush.xpose.msra.mxu0 %v39
    %63 = vmatpush.xpose.msra.mxu0 %v38
    %64 = vmatpush.xpose.msra.mxu0 %v37
    %65 = vmatpush.xpose.msra.mxu0 %v36
    %66 = vmatpush.xpose.msra.mxu0 %v35
    %67 = vmatmul.f32.gmra.mxu0 %v34
    %v68 = vpop.f32.mrf.mxu0
    %v69 = vadd.f32 0.0, %v68
    %70 = vdwg.mxu0
    %v71 = vld [vmem:[%s2] sm:$0xff]
    %73 = vset.pattern.permute.xlu0 0
    %74 = vperm.xlu0 %73, %v71
    %v75 = vpop.permute.xlu0 %74
    %v77 = vmul.f32 %v69, %v75
    %v78 = vld [vmem:[%s3] sm:$0x1]
    %v80 = vperm.slane %v78, 0
    %v82 = vmul.f32 %v77, %v80
    %83 = vst [vmem:[#allocation5] sm:$0xff] %v82
    // Predicated region
    $region22: #{tpu_custom_call.1} parent=1 // pred_check
      _
    $region23: #{tpu_custom_call.1} parent=1 // pred_check_branch
      %85 = sbr.rel (0) target = $region25
    $region24: #{tpu_custom_call.1} parent=1 // pred_region
      %87 = vsyncadd [#allocation4], 0
      %s89 = sshll.u32 [#allocation5], 4
      %s90 = int_to_ptr.vmem [resolvable:$true] %s89
      %s91 = sshll.u32 %s4, 4
      %s92 = int_to_ptr.hbm [resolvable:$true] %s91
      %94 = dma.vmem_to_hbm [thread:$0]  %s90, 128, %s92, [#allocation4]
    $region25: #{tpu_custom_call.1} parent=1 // pred_fallthru
      _
    // Predicated region
    $region26: #{tpu_custom_call.1} parent=1 // pred_check
      _
    $region27: #{tpu_custom_call.1} parent=1 // pred_check_branch
      %96 = sbr.rel (0) target = $region29
    $region28: #{tpu_custom_call.1} parent=1 // pred_region
      %98 = dma.done [#allocation4], 128
    $region29: #{tpu_custom_call.1} parent=1 // pred_fallthru
      _
    %99 = vsyncpa [#allocation3], 1
    %100 = vsyncpa [#allocation4], 1

</llo_original>
